<compile_context>
chip_gen: v6e
topology: v6e:2x2x1
jax: 0.10.0
libtpu: 0.0.40
codegen_flags: <defaults>
</compile_context>

<pallas_src>
import functools

import jax
import jax.numpy as jnp
from jax.experimental import pallas as pl
from jax.experimental.pallas import tpu as pltpu

BN_EPS = 1e-5
HIDDEN = 200
HIDDEN_PAD = 256          # lane-aligned (multiple of 128)
N_CLASSES = 10


def _round_up(x, m):
    return ((x + m - 1) // m) * m


# ---------------------------------------------------------------------------
# Kernel: fc1 -> bias + ReLU -> fc2' (BN folded) -> log_softmax
# ---------------------------------------------------------------------------
def classnet_kernel(x_ref, w1_ref, b1_ref, w2_ref, b2_ref, o_ref):
    x = x_ref[...]                                            # (TB, Z)

    # fc1 (MXU, f32 accumulate) + bias + ReLU
    h = jnp.dot(x, w1_ref[...], preferred_element_type=jnp.float32)
    h = jnp.maximum(h + b1_ref[...], 0.0)                     # (TB, Hp), f32

    # dropout: eval mode -> identity; BN: folded into w2'/b2'

    # fc2' (BN-folded)  — cast activations to the weight dtype (bf16 fast path)
    logits = jnp.dot(h.astype(w2_ref.dtype), w2_ref[...],
                     preferred_element_type=jnp.float32)
    logits = logits + b2_ref[...]                             # (TB, 10), f32

    # log_softmax over last dim (exp/log hit the otherwise-idle EUP slot)
    m = jnp.max(logits, axis=-1, keepdims=True)
    shifted = logits - m
    lse = jnp.log(jnp.sum(jnp.exp(shifted), axis=-1, keepdims=True))
    o_ref[...] = (shifted - lse).astype(o_ref.dtype)


# ---------------------------------------------------------------------------
# Wrapper: batch grid, weight-stationary BlockSpecs
# ---------------------------------------------------------------------------
@functools.partial(jax.jit, static_argnames=("block_b",))
def classnet_forward(x, w1p, b1p, w2p, b2f, *, block_b=256):
    B, Z = x.shape
    Hp = w1p.shape[1]
    C = w2p.shape[1]

    # Match activation dtype to the (possibly bf16) weights for the first matmul.
    x = x.astype(w1p.dtype)

    # Pick a batch tile: multiple of 8 sublanes, capped at block_b; pad B with
    # zero rows so the grid divides exactly (zero rows yield finite outputs and
    # are sliced off afterwards).
    b_pad = _round_up(B, 8)
    if b_pad <= block_b:
        tb = b_pad
    else:
        tb = block_b
        b_pad = _round_up(B, tb)
    if b_pad != B:
        x = jnp.pad(x, ((0, b_pad - B), (0, 0)))

    grid = (b_pad // tb,)

    out = pl.pallas_call(
        classnet_kernel,
        out_shape=jax.ShapeDtypeStruct((b_pad, C), jnp.float32),
        grid_spec=pltpu.PrefetchScalarGridSpec(
            num_scalar_prefetch=0,
            grid=grid,
            in_specs=[
                pl.BlockSpec((tb, Z), lambda i: (i, 0)),     # x: tiled over batch
                pl.BlockSpec((Z, Hp), lambda i: (0, 0)),     # w1: resident
                pl.BlockSpec((1, Hp), lambda i: (0, 0)),     # b1: resident
                pl.BlockSpec((Hp, C), lambda i: (0, 0)),     # w2' (BN-folded): resident
                pl.BlockSpec((1, C), lambda i: (0, 0)),      # b2': resident
            ],
            out_specs=pl.BlockSpec((tb, C), lambda i: (i, 0)),
        ),
        compiler_params=pltpu.CompilerParams(
            dimension_semantics=("parallel",)),               # 2 TCs on v7x
    )(x, w1p, b1p, w2p, b2f)

    return out[:B]


# ---------------------------------------------------------------------------
# Parameter prep: BN fold + hidden-dim padding (+ optional bf16 weights)
# ---------------------------------------------------------------------------
def fold_and_pad_params(w1, b1, gamma, beta, run_mean, run_var, w2, b2,
                        hidden_pad=HIDDEN_PAD, use_bf16=False):
    """Fold eval-mode BN into fc2 and zero-pad the hidden dim to `hidden_pad`."""
    scale = gamma * jax.lax.rsqrt(run_var + BN_EPS)           # (1, H)
    shift = beta - run_mean * scale                           # (1, H)
    w2f = scale.T * w2                                        # (H, C)
    b2f = shift @ w2 + b2                                     # (1, C)

    H = w1.shape[1]
    pad = hidden_pad - H
    w1p = jnp.pad(w1, ((0, 0), (0, pad)))                     # (Z, Hp)
    b1p = jnp.pad(b1, ((0, 0), (0, pad)))                     # (1, Hp)
    w2p = jnp.pad(w2f, ((0, pad), (0, 0)))                    # (Hp, C)

    if use_bf16:
        w1p = w1p.astype(jnp.bfloat16)
        w2p = w2p.astype(jnp.bfloat16)
    return w1p, b1p.astype(jnp.float32), w2p, b2f.astype(jnp.float32)


def init_params(key, z_dim, hidden=HIDDEN, n_classes=N_CLASSES):
    """Deterministic, PyTorch-Linear-like uniform init. Weights stored (in, out)."""
    k1, k2, k3, k4, k5, k6 = jax.random.split(key, 6)
    bound1 = 1.0 / jnp.sqrt(z_dim)
    w1 = jax.random.uniform(k1, (z_dim, hidden), jnp.float32, -bound1, bound1)
    b1 = jax.random.uniform(k2, (1, hidden), jnp.float32, -bound1, bound1)
    bound2 = 1.0 / jnp.sqrt(hidden)
    w2 = jax.random.uniform(k3, (hidden, n_classes), jnp.float32, -bound2, bound2)
    b2 = jax.random.uniform(k4, (1, n_classes), jnp.float32, -bound2, bound2)
    # BatchNorm1d params / running stats (non-trivial but deterministic).
    gamma = 1.0 + 0.1 * jax.random.normal(k5, (1, hidden), jnp.float32)
    beta = 0.1 * jax.random.normal(k6, (1, hidden), jnp.float32)
    run_mean = 0.05 * jax.random.normal(k1, (1, hidden), jnp.float32)
    run_var = 1.0 + 0.1 * jax.random.uniform(k2, (1, hidden), jnp.float32)
    return w1, b1, gamma, beta, run_mean, run_var, w2, b2


def reference_forward(x, w1, b1, gamma, beta, run_mean, run_var, w2, b2):
    h = jnp.maximum(x @ w1 + b1, 0.0)
    h = (h - run_mean) * jax.lax.rsqrt(run_var + BN_EPS) * gamma + beta
    logits = h @ w2 + b2
    return jax.nn.log_softmax(logits, axis=-1)


if __name__ == "__main__":
    key = jax.random.PRNGKey(0)
    k_x, k_x2, k_p = jax.random.split(key, 3)

    Z = 32  # z_dim consistent with fc1(z_dim -> 200)
    raw_params = init_params(k_p, Z)

    # ---- small batch, f32 path (tight correctness check) ----
    B = 8
    x = jax.random.normal(k_x, (B, Z), jnp.float32)
    params_f32 = fold_and_pad_params(*raw_params, use_bf16=False)
    out = jax.block_until_ready(classnet_forward(x, *params_f32))
    ref = reference_forward(x, *raw_params)
    assert out.shape == (B, N_CLASSES)
    assert jnp.allclose(out, ref, atol=1e-4, rtol=1e-4), "f32 mismatch vs reference"
    assert jnp.allclose(jnp.sum(jnp.exp(out), axis=-1), 1.0, atol=1e-4)

    # ---- larger, non-divisible batch exercising the grid + padding ----
    B2 = 1000
    x2 = jax.random.normal(k_x2, (B2, Z), jnp.float32)
    out2 = jax.block_until_ready(classnet_forward(x2, *params_f32, block_b=256))
    ref2 = reference_forward(x2, *raw_params)
    assert out2.shape == (B2, N_CLASSES)
    assert jnp.allclose(out2, ref2, atol=1e-4, rtol=1e-4), "tiled f32 mismatch"

    # ---- bf16 fast path (loose check; f32 accumulation retained) ----
    params_bf16 = fold_and_pad_params(*raw_params, use_bf16=True)
    out_bf = jax.block_until_ready(classnet_forward(x2, *params_bf16, block_b=256))
    assert out_bf.shape == (B2, N_CLASSES)
    assert bool(jnp.all(jnp.isfinite(out_bf)))
    assert jnp.allclose(jnp.sum(jnp.exp(out_bf), axis=-1), 1.0, atol=2e-2)
    assert jnp.allclose(out_bf, ref2, atol=1e-1, rtol=1e-1), "bf16 mismatch vs reference"

    print("KERNEL_OK")
</pallas_src>

<mosaic_0001>
module attributes {stable_mosaic.version = 11 : i64} {
  func.func @classnet_kernel(%arg0: i32, %arg1: memref<8x32xf32, #tpu.memory_space<vmem>>, %arg2: memref<32x256xf32, #tpu.memory_space<vmem>>, %arg3: memref<1x256xf32, #tpu.memory_space<vmem>>, %arg4: memref<256x10xf32, #tpu.memory_space<vmem>>, %arg5: memref<1x10xf32, #tpu.memory_space<vmem>>, %arg6: memref<8x10xf32, #tpu.memory_space<vmem>>) attributes {dimension_semantics = [#tpu.dimension_semantics<parallel>], iteration_bounds = array<i64: 1>, scalar_prefetch = 0 : i64, scratch_operands = 0 : i64, tpu.core_type = #tpu.core_type<tc>, window_params = [{transform_indices = @transform_0, window_bounds = array<i64: 8, 32>}, {pipeline_mode = #tpu.pipeline_mode<synchronous>, transform_indices = @transform_1, window_bounds = array<i64: 32, 256>}, {pipeline_mode = #tpu.pipeline_mode<synchronous>, transform_indices = @transform_2, window_bounds = array<i64: 1, 256>}, {pipeline_mode = #tpu.pipeline_mode<synchronous>, transform_indices = @transform_3, window_bounds = array<i64: 256, 10>}, {pipeline_mode = #tpu.pipeline_mode<synchronous>, transform_indices = @transform_4, window_bounds = array<i64: 1, 10>}, {transform_indices = @transform_5, window_bounds = array<i64: 8, 10>}]} {
    %c0 = arith.constant 0 : index
    %c0_0 = arith.constant 0 : index
    %0 = vector.load %arg1[%c0, %c0_0] : memref<8x32xf32, #tpu.memory_space<vmem>>, vector<8x32xf32>
    %c0_1 = arith.constant 0 : index
    %c0_2 = arith.constant 0 : index
    %1 = vector.load %arg2[%c0_1, %c0_2] : memref<32x256xf32, #tpu.memory_space<vmem>>, vector<32x256xf32>
    %cst = arith.constant dense<0.000000e+00> : vector<8x256xf32>
    %2 = tpu.matmul %0, %1, %cst {dimension_numbers = #tpu.dot_dimension_numbers<[1], [0], [0], [1], [0, 0, 1, 1], [], []>} : vector<8x32xf32>, vector<32x256xf32>, vector<8x256xf32> -> vector<8x256xf32>
    %c0_3 = arith.constant 0 : index
    %c0_4 = arith.constant 0 : index
    %3 = vector.load %arg3[%c0_3, %c0_4] : memref<1x256xf32, #tpu.memory_space<vmem>>, vector<1x256xf32>
    %4 = vector.broadcast %3 : vector<1x256xf32> to vector<8x256xf32>
    %5 = arith.addf %2, %4 : vector<8x256xf32>
    %cst_5 = arith.constant 0.000000e+00 : f32
    %6 = vector.broadcast %cst_5 : f32 to vector<8x256xf32>
    %7 = arith.maximumf %5, %6 : vector<8x256xf32>
    %c0_6 = arith.constant 0 : index
    %c0_7 = arith.constant 0 : index
    %8 = vector.load %arg4[%c0_6, %c0_7] : memref<256x10xf32, #tpu.memory_space<vmem>>, vector<256x10xf32>
    %cst_8 = arith.constant dense<0.000000e+00> : vector<8x10xf32>
    %9 = tpu.matmul %7, %8, %cst_8 {dimension_numbers = #tpu.dot_dimension_numbers<[1], [0], [0], [1], [0, 0, 1, 1], [], []>} : vector<8x256xf32>, vector<256x10xf32>, vector<8x10xf32> -> vector<8x10xf32>
    %c0_9 = arith.constant 0 : index
    %c0_10 = arith.constant 0 : index
    %10 = vector.load %arg5[%c0_9, %c0_10] : memref<1x10xf32, #tpu.memory_space<vmem>>, vector<1x10xf32>
    %11 = vector.broadcast %10 : vector<1x10xf32> to vector<8x10xf32>
    %12 = arith.addf %9, %11 : vector<8x10xf32>
    %cst_11 = arith.constant dense<0xFF800000> : vector<8xf32>
    %13 = vector.multi_reduction <maximumf>, %12, %cst_11 [1] : vector<8x10xf32> to vector<8xf32>
    %14 = vector.shape_cast %13 : vector<8xf32> to vector<8x1xf32>
    %15 = vector.broadcast %14 : vector<8x1xf32> to vector<8x10xf32>
    %16 = arith.subf %12, %15 : vector<8x10xf32>
    %17 = math.exp %16 : vector<8x10xf32>
    %cst_12 = arith.constant dense<0.000000e+00> : vector<8xf32>
    %18 = vector.multi_reduction <add>, %17, %cst_12 [1] : vector<8x10xf32> to vector<8xf32>
    %19 = vector.shape_cast %18 : vector<8xf32> to vector<8x1xf32>
    %20 = math.log %19 : vector<8x1xf32>
    %21 = vector.broadcast %20 : vector<8x1xf32> to vector<8x10xf32>
    %22 = arith.subf %16, %21 : vector<8x10xf32>
    %c0_13 = arith.constant 0 : index
    %c0_14 = arith.constant 0 : index
    %23 = vector.load %arg6[%c0_13, %c0_14] : memref<8x10xf32, #tpu.memory_space<vmem>>, vector<8x10xf32>
    tpu.vector_store %arg6[%c0_13, %c0_14], %22 {strides = array<i32>} : memref<8x10xf32, #tpu.memory_space<vmem>>, vector<8x10xf32>,
    return
  }
  func.func @transform_0(%arg0: i32) -> (i32, i32) {
    %c0_i32 = arith.constant 0 : i32
    %c0_i32_0 = arith.constant 0 : i32
    return %arg0, %c0_i32 : i32, i32
  }
  func.func @transform_1(%arg0: i32) -> (i32, i32) {
    %c0_i32 = arith.constant 0 : i32
    %c0_i32_0 = arith.constant 0 : i32
    %c0_i32_1 = arith.constant 0 : i32
    return %c0_i32, %c0_i32_0 : i32, i32
  }
  func.func @transform_2(%arg0: i32) -> (i32, i32) {
    %c0_i32 = arith.constant 0 : i32
    %c0_i32_0 = arith.constant 0 : i32
    %c0_i32_1 = arith.constant 0 : i32
    return %c0_i32, %c0_i32_0 : i32, i32
  }
  func.func @transform_3(%arg0: i32) -> (i32, i32) {
    %c0_i32 = arith.constant 0 : i32
    %c0_i32_0 = arith.constant 0 : i32
    %c0_i32_1 = arith.constant 0 : i32
    return %c0_i32, %c0_i32_0 : i32, i32
  }
  func.func @transform_4(%arg0: i32) -> (i32, i32) {
    %c0_i32 = arith.constant 0 : i32
    %c0_i32_0 = arith.constant 0 : i32
    %c0_i32_1 = arith.constant 0 : i32
    return %c0_i32, %c0_i32_0 : i32, i32
  }
  func.func @transform_5(%arg0: i32) -> (i32, i32) {
    %c0_i32 = arith.constant 0 : i32
    %c0_i32_0 = arith.constant 0 : i32
    return %arg0, %c0_i32 : i32, i32
  }
}

</mosaic_0001>

<llo_original>
// kernel: classnet_forward.1
$region0: #{classnet_forward.1}
  #allocation0 [shape = 'u32[]', space=smem, size = 0x4, offset = 0x4, fixed_abs, tag = 'smem constant byte address 0x4 - core index']
  #allocation1 [shape = 'u32[144,128]{1,0:T(1,128)}', space=vmem, size = 0x12000, scoped, tag = 'internal scratch']
  %s0 = inlined_call_operand.vmem [shape: f32[8,32], index: 0, kind: input, shape index: {}]
  %s1 = inlined_call_operand.vmem [shape: f32[32,256], index: 1, kind: input, shape index: {}]
  %s2 = inlined_call_operand.vmem [shape: f32[1,256], index: 2, kind: input, shape index: {}]
  %s3 = inlined_call_operand.vmem [shape: f32[256,10], index: 3, kind: input, shape index: {}]
  %s4 = inlined_call_operand.vmem [shape: f32[1,10], index: 4, kind: input, shape index: {}]
  %s5 = inlined_call_operand.hbm [shape: f32[8,10], index: 5, kind: output, shape index: {}]
  %s6 = sld [smem:[#allocation0]]
  $region30: #{classnet_forward.1} parent=0
    _
  %s8 = ssub.s32 1, %s6
  %s9 = scalar_select 0, %s8, %s6
  $region1: #{classnet_forward.1} parent=0
    #allocation2 [shape = 'u8[4096]{0}', space=vmem, size = 0x1000, scoped, tag = 'output window, operand 0, single buffered']
    #allocation3 [shape = 's32[1]{0}', space=sflag, size = 0x4, scoped, tag = 'scoped memory for classnet_forward.1']
    %10 = vsyncpa [#allocation3], 0
    // Predicated region
    $region2: #{classnet_forward.1} parent=1 // pred_check
      _
    $region3: #{classnet_forward.1} parent=1 // pred_check_branch
      %12 = sbr.rel (0) target = $region5
    $region4: #{classnet_forward.1} parent=1 // pred_region
      _
    $region5: #{classnet_forward.1} parent=1 // pred_fallthru
      _
    // Predicated region
    $region6: #{classnet_forward.1} parent=1 // pred_check
      _
    $region7: #{classnet_forward.1} parent=1 // pred_check_branch
      %14 = sbr.rel (0) target = $region9
    $region8: #{classnet_forward.1} parent=1 // pred_region
      _
    $region9: #{classnet_forward.1} parent=1 // pred_fallthru
      _
    // Predicated region
    $region10: #{classnet_forward.1} parent=1 // pred_check
      _
    $region11: #{classnet_forward.1} parent=1 // pred_check_branch
      %16 = sbr.rel (0) target = $region13
    $region12: #{classnet_forward.1} parent=1 // pred_region
      _
    $region13: #{classnet_forward.1} parent=1 // pred_fallthru
      _
    // Predicated region
    $region14: #{classnet_forward.1} parent=1 // pred_check
      _
    $region15: #{classnet_forward.1} parent=1 // pred_check_branch
      %18 = sbr.rel (0) target = $region17
    $region16: #{classnet_forward.1} parent=1 // pred_region
      _
    $region17: #{classnet_forward.1} parent=1 // pred_fallthru
      _
    // Predicated region
    $region18: #{classnet_forward.1} parent=1 // pred_check
      _
    $region19: #{classnet_forward.1} parent=1 // pred_check_branch
      %20 = sbr.rel (0) target = $region21
    $region20: #{classnet_forward.1} parent=1 // pred_region
      _
    $region21: #{classnet_forward.1} parent=1 // pred_fallthru
      _
    %v21 = vld [vmem:[%s0] sm:$0xff]
    %v22 = vld [vmem:[%s1] sm:$0xff]
    %v23 = vld [vmem:[%s1 + $0x8] sm:$0xff]
    %v24 = vld [vmem:[%s1 + $0x10] sm:$0xff]
    %v25 = vld [vmem:[%s1 + $0x18] sm:$0xff]
    %v26 = vld [vmem:[%s1 + $0x20] sm:$0xff]
    %v27 = vld [vmem:[%s1 + $0x28] sm:$0xff]
    %v28 = vld [vmem:[%s1 + $0x30] sm:$0xff]
    %v29 = vld [vmem:[%s1 + $0x38] sm:$0xff]
    %v30 = vld [vmem:[%s2] sm:$0x3]
    %v32 = vlaneseq
    %v33 = vshrl.u32 %v32, 7
    %v34 = vsub.s32 0, %v33
    %v35 = vrot.slane %v30, %v34
    %v36 = vlaneseq
    %v37 = vshrl.u32 %v36, 7
    %v38 = vsub.s32 1, %v37
    %v39 = vrot.slane %v30, %v38
    %vm42 = vcmask 261120
    %v44 = vsel %vm42, %v21, 0
    %46 = vmatprep.subr.mxu0 0.0
    %47 = vmatpush1.msra.mxu0 0.0
    %48 = vmatprep.subr.mxu0 0.0
    %49 = vmatpush1.msra.mxu0 0.0
    %50 = vmatprep.subr.mxu0 0.0
    %51 = vmatpush1.msra.mxu0 0.0
    %52 = vmatprep.subr.mxu0 0.0
    %53 = vmatpush1.msra.mxu0 0.0
    %54 = vmatprep.subr.mxu0 0.0
    %55 = vmatpush1.msra.mxu0 0.0
    %56 = vmatprep.subr.mxu0 0.0
    %57 = vmatpush1.msra.mxu0 0.0
    %58 = vmatprep.subr.mxu0 0.0
    %59 = vmatpush1.msra.mxu0 0.0
    %60 = vmatprep.subr.mxu0 0.0
    %61 = vmatpush1.msra.mxu0 0.0
    %62 = vmatprep.subr.mxu0 0.0
    %63 = vmatpush1.msra.mxu0 0.0
    %64 = vmatprep.subr.mxu0 0.0
    %65 = vmatpush1.msra.mxu0 0.0
    %66 = vmatprep.subr.mxu0 0.0
    %67 = vmatpush1.msra.mxu0 0.0
    %68 = vmatprep.subr.mxu0 0.0
    %69 = vmatpush1.msra.mxu0 0.0
    %70 = vmatprep.subr.mxu0 %v29
    %71 = vmatpush1.msra.mxu0 %v28
    %72 = vmatprep.subr.mxu0 %v27
    %73 = vmatpush1.msra.mxu0 %v26
    %74 = vmatprep.subr.mxu0 %v25
    %75 = vmatpush1.msra.mxu0 %v24
    %76 = vmatprep.subr.mxu0 %v23
    %77 = vmatpush1.msra.mxu0 %v22
    %78 = vmatprep.subr.mxu0 0.0
    %79 = vmatpush2.msra.mxu0 0.0
    %80 = vmatprep.subr.mxu0 0.0
    %81 = vmatpush2.msra.mxu0 0.0
    %82 = vmatprep.subr.mxu0 0.0
    %83 = vmatpush2.msra.mxu0 0.0
    %84 = vmatprep.subr.mxu0 0.0
    %85 = vmatpush2.msra.mxu0 0.0
    %86 = vmatprep.subr.mxu0 0.0
    %87 = vmatpush2.msra.mxu0 0.0
    %88 = vmatprep.subr.mxu0 0.0
    %89 = vmatpush2.msra.mxu0 0.0
    %90 = vmatprep.subr.mxu0 0.0
    %91 = vmatpush2.msra.mxu0 0.0
    %92 = vmatprep.subr.mxu0 0.0
    %93 = vmatpush2.msra.mxu0 0.0
    %94 = vmatprep.subr.mxu0 0.0
    %95 = vmatpush2.msra.mxu0 0.0
    %96 = vmatprep.subr.mxu0 0.0
    %97 = vmatpush2.msra.mxu0 0.0
    %98 = vmatprep.subr.mxu0 0.0
    %99 = vmatpush2.msra.mxu0 0.0
    %100 = vmatprep.subr.mxu0 0.0
    %101 = vmatpush2.msra.mxu0 0.0
    %102 = vmatprep.subr.mxu0 0.0
    %103 = vmatpush2.msra.mxu0 0.0
    %104 = vmatprep.subr.mxu0 0.0
    %105 = vmatpush2.msra.mxu0 0.0
    %106 = vmatprep.subr.mxu0 0.0
    %107 = vmatpush2.msra.mxu0 0.0
    %108 = vmatprep.subr.mxu0 0.0
    %109 = vmatpush2.msra.mxu0 0.0
    %110 = vmatprep.mubr.f32.mxu0 0.0
    %111 = vmatmul.mubr.f32.gmra.mxu0 %v44
    %v112 = vpop.f32.mrf.mxu0
    %v113 = vadd.f32 %v35, %v112
    %v114 = vpop.f32.mrf.mxu0
    %v115 = vadd.f32 %v39, %v114
    %116 = vdwg.mxu0
    %v117 = vmax.f32 %v113, 0.0
    %v118 = vmax.f32 %v115, 0.0
    %v119 = vld [vmem:[%s3] sm:$0xff]
    %v120 = vld [vmem:[%s3 + $0x8] sm:$0xff]
    %v121 = vld [vmem:[%s3 + $0x10] sm:$0xff]
    %v122 = vld [vmem:[%s3 + $0x18] sm:$0xff]
    %v123 = vld [vmem:[%s3 + $0x20] sm:$0xff]
    %v124 = vld [vmem:[%s3 + $0x28] sm:$0xff]
    %v125 = vld [vmem:[%s3 + $0x30] sm:$0xff]
    %v126 = vld [vmem:[%s3 + $0x38] sm:$0xff]
    %v127 = vld [vmem:[%s3 + $0x40] sm:$0xff]
    %v128 = vld [vmem:[%s3 + $0x48] sm:$0xff]
    %v129 = vld [vmem:[%s3 + $0x50] sm:$0xff]
    %v130 = vld [vmem:[%s3 + $0x58] sm:$0xff]
    %v131 = vld [vmem:[%s3 + $0x60] sm:$0xff]
    %v132 = vld [vmem:[%s3 + $0x68] sm:$0xff]
    %v133 = vld [vmem:[%s3 + $0x70] sm:$0xff]
    %v134 = vld [vmem:[%s3 + $0x78] sm:$0xff]
    %v135 = vld [vmem:[%s3 + $0x80] sm:$0xff]
    %v136 = vld [vmem:[%s3 + $0x88] sm:$0xff]
    %v137 = vld [vmem:[%s3 + $0x90] sm:$0xff]
    %v138 = vld [vmem:[%s3 + $0x98] sm:$0xff]
    %v139 = vld [vmem:[%s3 + $0xa0] sm:$0xff]
    %v140 = vld [vmem:[%s3 + $0xa8] sm:$0xff]
    %v141 = vld [vmem:[%s3 + $0xb0] sm:$0xff]
    %v142 = vld [vmem:[%s3 + $0xb8] sm:$0xff]
    %v143 = vld [vmem:[%s3 + $0xc0] sm:$0xff]
    %v144 = vld [vmem:[%s3 + $0xc8] sm:$0xff]
    %v145 = vld [vmem:[%s3 + $0xd0] sm:$0xff]
    %v146 = vld [vmem:[%s3 + $0xd8] sm:$0xff]
    %v147 = vld [vmem:[%s3 + $0xe0] sm:$0xff]
    %v148 = vld [vmem:[%s3 + $0xe8] sm:$0xff]
    %v149 = vld [vmem:[%s3 + $0xf0] sm:$0xff]
    %v150 = vld [vmem:[%s3 + $0xf8] sm:$0xff]
    %v151 = vld [vmem:[%s4] sm:$0x1]
    %v153 = vlaneseq
    %v154 = vshrl.u32 %v153, 7
    %v155 = vsub.s32 0, %v154
    %v156 = vrot.slane %v151, %v155
    %158 = vmatprep.subr.mxu0 0.0
    %159 = vmatpush1.msra.mxu0 %v134
    %160 = vmatprep.subr.mxu0 0.0
    %161 = vmatpush1.msra.mxu0 %v133
    %162 = vmatprep.subr.mxu0 0.0
    %163 = vmatpush1.msra.mxu0 %v132
    %164 = vmatprep.subr.mxu0 0.0
    %165 = vmatpush1.msra.mxu0 %v131
    %166 = vmatprep.subr.mxu0 0.0
    %167 = vmatpush1.msra.mxu0 %v130
    %168 = vmatprep.subr.mxu0 0.0
    %169 = vmatpush1.msra.mxu0 %v129
    %170 = vmatprep.subr.mxu0 0.0
    %171 = vmatpush1.msra.mxu0 %v128
    %172 = vmatprep.subr.mxu0 0.0
    %173 = vmatpush1.msra.mxu0 %v127
    %174 = vmatprep.subr.mxu0 0.0
    %175 = vmatpush1.msra.mxu0 %v126
    %176 = vmatprep.subr.mxu0 0.0
    %177 = vmatpush1.msra.mxu0 %v125
    %178 = vmatprep.subr.mxu0 0.0
    %179 = vmatpush1.msra.mxu0 %v124
    %180 = vmatprep.subr.mxu0 0.0
    %181 = vmatpush1.msra.mxu0 %v123
    %182 = vmatprep.subr.mxu0 0.0
    %183 = vmatpush1.msra.mxu0 %v122
    %184 = vmatprep.subr.mxu0 0.0
    %185 = vmatpush1.msra.mxu0 %v121
    %186 = vmatprep.subr.mxu0 0.0
    %187 = vmatpush1.msra.mxu0 %v120
    %188 = vmatprep.subr.mxu0 0.0
    %189 = vmatpush1.msra.mxu0 %v119
    %190 = vmatprep.subr.mxu0 0.0
    %191 = vmatpush2.msra.mxu0 %v150
    %192 = vmatprep.subr.mxu0 0.0
    %193 = vmatpush2.msra.mxu0 %v149
    %194 = vmatprep.subr.mxu0 0.0
    %195 = vmatpush2.msra.mxu0 %v148
    %196 = vmatprep.subr.mxu0 0.0
    %197 = vmatpush2.msra.mxu0 %v147
    %198 = vmatprep.subr.mxu0 0.0
    %199 = vmatpush2.msra.mxu0 %v146
    %200 = vmatprep.subr.mxu0 0.0
    %201 = vmatpush2.msra.mxu0 %v145
    %202 = vmatprep.subr.mxu0 0.0
    %203 = vmatpush2.msra.mxu0 %v144
    %204 = vmatprep.subr.mxu0 0.0
    %205 = vmatpush2.msra.mxu0 %v143
    %206 = vmatprep.subr.mxu0 0.0
    %207 = vmatpush2.msra.mxu0 %v142
    %208 = vmatprep.subr.mxu0 0.0
    %209 = vmatpush2.msra.mxu0 %v141
    %210 = vmatprep.subr.mxu0 0.0
    %211 = vmatpush2.msra.mxu0 %v140
    %212 = vmatprep.subr.mxu0 0.0
    %213 = vmatpush2.msra.mxu0 %v139
    %214 = vmatprep.subr.mxu0 0.0
    %215 = vmatpush2.msra.mxu0 %v138
    %216 = vmatprep.subr.mxu0 0.0
    %217 = vmatpush2.msra.mxu0 %v137
    %218 = vmatprep.subr.mxu0 0.0
    %219 = vmatpush2.msra.mxu0 %v136
    %220 = vmatprep.subr.mxu0 0.0
    %221 = vmatpush2.msra.mxu0 %v135
    %222 = vmatprep.mubr.f32.mxu0 %v118
    %223 = vmatmul.mubr.f32.gmra.mxu0 %v117
    %v224 = vpop.f32.mrf.mxu0
    %v225 = vadd.f32 %v156, %v224
    %v226 = vpop.f32.mrf.mxu0
    %227 = vdwg.mxu0
    %vm228 = vcmask 80896
    %v229 = vsel %vm228, %v225, -inf
    %230 = vmax.xlane.f32.xlu0 %v229
    %v231 = vpop.xlane.xlu0 %230
    %v232 = vsub.f32 %v225, %v231
    %v233 = vmul.f32 %v232, 1.442695
    %v234 = vpow.pop %v233
    %v235 = vsel %vm228, %v234, 0.0
    %236 = vadd.xlane.f32.xlu0 %v235
    %v237 = vpop.xlane.xlu0 %236
    %v238 = vlog2.pop %v237
    %v239 = vmul.f32 %v238, 0.6931472
    %v240 = vsub.f32 %v232, %v239
    %241 = vst.msk [vmem:[#allocation2] sm:$0xff] %vm228, %v240
    // Predicated region
    $region22: #{classnet_forward.1} parent=1 // pred_check
      _
    $region23: #{classnet_forward.1} parent=1 // pred_check_branch
      %243 = sbr.rel (0) target = $region25
    $region24: #{classnet_forward.1} parent=1 // pred_region
      %s245 = ssub.s32 128, 128
      %246 = vsyncadd [#allocation3], %s245
      %s248 = sshll.u32 [#allocation2], 4
      %s249 = int_to_ptr.vmem [resolvable:$true] %s248
      %251 = dma.vmem_to_hbm [thread:$0]  %s249, 128, %s5, [#allocation3]
    $region25: #{classnet_forward.1} parent=1 // pred_fallthru
      _
    // Predicated region
    $region26: #{classnet_forward.1} parent=1 // pred_check
      _
    $region27: #{classnet_forward.1} parent=1 // pred_check_branch
      %253 = sbr.rel (0) target = $region29
    $region28: #{classnet_forward.1} parent=1 // pred_region
      %254 = dma.done [#allocation3], 128
    $region29: #{classnet_forward.1} parent=1 // pred_fallthru
      _
    %255 = vsyncpa [#allocation3], 1

</llo_original>
